<compile_context>
chip_gen: v5e
topology: v5e:2x2
jax: 0.10.0
libtpu: 0.0.40
codegen_flags: <defaults>
</compile_context>

<pallas_src>
import functools

import jax
import jax.numpy as jnp
import numpy as np
from jax import lax
from jax.experimental import pallas as pl
from jax.experimental.pallas import tpu as pltpu


def _dilated_conv_unit_kernel(K, D, PAD, L, B, x_ref, w_ref, b_ref, lpos_ref,
                              o_ref, flat_ref):
    """One grid step = B whole length-L sequences.

    x_ref    : (B, C, L)   native-layout input block (contiguous HBM DMA)
    w_ref    : (K, C, C)   bf16 conv weight, tap-major
    b_ref    : (C, 1)      f32 conv bias
    lpos_ref : (1, B*L)    int32 position of each flat lane inside its sequence
    o_ref    : (B, C, L)   native-layout output block
    flat_ref : (C, B*L)    f32 VMEM scratch for the lane-dense working slab
    """
    BL = B * L

    # ---- (B, C, L) -> (C, B*L): VMEM-only interleave (no HBM transpose). ----
    for b in range(B):                                     # B static & small
        flat_ref[:, b * L:(b + 1) * L] = x_ref[b].astype(flat_ref.dtype)

    x32 = flat_ref[...]                                    # (C, BL) f32
    lpos = lpos_ref[...]                                   # (1, BL) int32

    # Residual + bias seed the f32 accumulator; conv taps are added on top.
    acc = x32 + b_ref[...]

    # K dilated taps: lane roll (XLU, otherwise idle) + one-sided edge mask
    # (implements the "same" zero padding AND stops leakage between the B
    # sequences packed on the lane axis), then one (C,C) x (C,BL) MXU dot per
    # tap with bf16 operands and f32 accumulation.
    for k in range(K):                                     # K static & small
        off = k * D - PAD                                  # tap offset along L
        if off == 0:
            tap = x32
        else:
            # shifted[:, g] = x32[:, g + off]; out-of-sequence columns zeroed.
            shifted = pltpu.roll(x32, shift=(-off) % BL, axis=1)
            valid = (lpos < L - off) if off > 0 else (lpos >= -off)
            tap = jnp.where(valid, shifted, 0.0)
        acc = acc + jnp.dot(w_ref[k], tap.astype(jnp.bfloat16),
                            preferred_element_type=jnp.float32)

    # ---- (C, B*L) -> (B, C, L): reuse the scratch, store in native layout. ----
    flat_ref[...] = acc
    for b in range(B):
        o_ref[b] = flat_ref[:, b * L:(b + 1) * L].astype(o_ref.dtype)


def _vmem_bytes_estimate(B, C, L, K):
    """Coarse per-step VMEM estimate (lane-padded), incl. double buffering."""
    lane = lambda n: -(-n // 128) * 128
    nat_blk = B * C * lane(L) * 4          # one (B, C, L) f32 block buffer
    flat = C * lane(B * L)                 # lane-dense slab (elements)
    est = 2 * 2 * nat_blk                  # double-buffered in + out blocks
    est += flat * 4                        # f32 flat scratch
    est += 3 * flat * 4                    # x / tap / acc live values (coarse)
    est += 2 * (K * C * C * 2 + C * 4 + lane(B * L) * 4)   # weight/bias/lane_pos
    return est


def _choose_block_batch(N, C, L, K):
    """Pick sequences-per-step B (perf review items 2–4).

    Prefer lane width B*L in [512, 2048] when the batch allows it, keep >= 2
    (ideally an even number of) grid steps so both v7x TensorCores get work,
    and keep the per-step VMEM estimate well under the 32 MiB scoped budget
    (v7x only has 64 MiB physical VMEM).
    """
    budget = 12 << 20
    divisors = [b for b in range(1, N + 1) if N % b == 0]
    good = [b for b in divisors
            if _vmem_bytes_estimate(b, C, L, K) <= budget
            and (N < 2 or N // b >= 2)]
    if not good:
        return 1
    in_range = [b for b in good if 512 <= b * L <= 2048]
    pool = in_range or good
    even = [b for b in pool if (N // b) % 2 == 0]
    pool = even or pool
    return max(pool)


def dilated_conv_unit_forward(x, weight, bias, *, dilation, block_batch=None):
    """x: (N, C, L) f32; weight: (C, C, K) [PyTorch OIK]; bias: (C,)."""
    N, C, L = x.shape
    c_out, c_in, K = weight.shape
    assert c_out == C and c_in == C, "DilatedConvolutionalUnit is channel-preserving"
    # Mirror of the module's own implicit constraint: 'same' length (needed by
    # the residual add) requires (K-1)*dilation to be even.
    assert (K - 1) * dilation % 2 == 0, "(kernel_size-1)*dilation must be even"
    pad = (K - 1) * dilation // 2

    B = _choose_block_batch(N, C, L, K) if block_batch is None else block_batch
    assert N % B == 0, "block_batch must divide N"

    # Tap-major weight, bf16 MXU operand (accumulation stays f32 in-kernel).
    w_taps = jnp.transpose(weight, (2, 0, 1)).astype(jnp.bfloat16)   # (K, C, C)
    b2d = bias.reshape(C, 1).astype(jnp.float32)
    # Precomputed per-sequence lane positions: no iota / modulo in the kernel.
    lane_pos = jnp.tile(jnp.arange(L, dtype=jnp.int32)[None, :], (1, B))  # (1, B*L)

    kern = functools.partial(_dilated_conv_unit_kernel, K, dilation, pad, L, B)

    return pl.pallas_call(
        kern,
        out_shape=jax.ShapeDtypeStruct((N, C, L), x.dtype),
        grid_spec=pltpu.PrefetchScalarGridSpec(
            num_scalar_prefetch=0,
            grid=(N // B,),
            in_specs=[
                pl.BlockSpec((B, C, L), lambda i: (i, 0, 0)),   # contiguous HBM DMA
                pl.BlockSpec((K, C, C), lambda i: (0, 0, 0)),
                pl.BlockSpec((C, 1), lambda i: (0, 0)),
                pl.BlockSpec((1, B * L), lambda i: (0, 0)),
            ],
            out_specs=pl.BlockSpec((B, C, L), lambda i: (i, 0, 0)),
            scratch_shapes=[pltpu.VMEM((C, B * L), jnp.float32)],
        ),
        compiler_params=pltpu.CompilerParams(
            dimension_semantics=("parallel",),
            # Explicit scoped-VMEM budget: raises v5e's 16 MiB default, stays at
            # the v6e/v7x defaults; the B heuristic keeps the estimate <= 12 MiB.
            vmem_limit_bytes=32 * 1024 * 1024),
    )(x, w_taps, b2d, lane_pos)


def dilated_conv_unit_reference(x, weight, bias, *, dilation):
    """Pure-JAX reference (glue only).  Conv operands are quantized to bf16 —
    matching the kernel's MXU operand dtype — then the conv is evaluated in
    exact f32; residual and bias stay f32, as in the kernel."""
    N, C, L = x.shape
    K = weight.shape[-1]
    pad = (K - 1) * dilation // 2
    xq = x.astype(jnp.bfloat16).astype(jnp.float32)
    wq = weight.astype(jnp.bfloat16).astype(jnp.float32)
    xp = jnp.pad(xq, ((0, 0), (0, 0), (pad, pad)))
    conv = jnp.zeros((N, C, L), jnp.float32)
    for k in range(K):
        xs = lax.dynamic_slice_in_dim(xp, k * dilation, L, axis=2)   # (N, C, L)
        conv = conv + jnp.einsum("oc,ncl->nol", wq[:, :, k], xs,
                                 precision=lax.Precision.HIGHEST)
    return x + conv + bias[None, :, None]


if __name__ == "__main__":
    N, C, L = 8, 8, 32
    K, DIL = 3, 2

    key = jax.random.PRNGKey(0)
    kx, kw, kb = jax.random.split(key, 3)
    x = jax.random.normal(kx, (N, C, L), jnp.float32)
    weight = 0.2 * jax.random.normal(kw, (C, C, K), jnp.float32)
    bias = 0.1 * jax.random.normal(kb, (C,), jnp.float32)

    # B is derived automatically (here: B=4 -> 2 parallel grid steps, lane
    # width 128, native-layout contiguous HBM blocks, no wrapper transposes).
    out = dilated_conv_unit_forward(x, weight, bias, dilation=DIL)
    out = jax.block_until_ready(out)

    ref = dilated_conv_unit_reference(x, weight, bias, dilation=DIL)
    np.testing.assert_allclose(np.asarray(out), np.asarray(ref),
                               atol=2e-4, rtol=2e-4)
    print("KERNEL_OK")
</pallas_src>

<mosaic_0001>
module attributes {stable_mosaic.version = 11 : i64} {
  func.func @_dilated_conv_unit_kernel(%arg0: i32, %arg1: memref<4x8x32xf32, #tpu.memory_space<vmem>>, %arg2: memref<3x8x8xbf16, #tpu.memory_space<vmem>>, %arg3: memref<8x1xf32, #tpu.memory_space<vmem>>, %arg4: memref<1x128xi32, #tpu.memory_space<vmem>>, %arg5: memref<4x8x32xf32, #tpu.memory_space<vmem>>, %arg6: memref<8x128xf32, #tpu.memory_space<vmem>>) attributes {dimension_semantics = [#tpu.dimension_semantics<parallel>], iteration_bounds = array<i64: 2>, scalar_prefetch = 0 : i64, scratch_operands = 1 : i64, tpu.core_type = #tpu.core_type<tc>, window_params = [{transform_indices = @transform_0, window_bounds = array<i64: 4, 8, 32>}, {pipeline_mode = #tpu.pipeline_mode<synchronous>, transform_indices = @transform_1, window_bounds = array<i64: 3, 8, 8>}, {pipeline_mode = #tpu.pipeline_mode<synchronous>, transform_indices = @transform_2, window_bounds = array<i64: 8, 1>}, {pipeline_mode = #tpu.pipeline_mode<synchronous>, transform_indices = @transform_3, window_bounds = array<i64: 1, 128>}, {transform_indices = @transform_4, window_bounds = array<i64: 4, 8, 32>}]} {
    %c0 = arith.constant 0 : index
    %c0_0 = arith.constant 0 : index
    %c0_1 = arith.constant 0 : index
    %0 = vector.load %arg1[%c0, %c0_0, %c0_1] : memref<4x8x32xf32, #tpu.memory_space<vmem>>, vector<1x8x32xf32>
    %1 = vector.shape_cast %0 : vector<1x8x32xf32> to vector<8x32xf32>
    %c0_2 = arith.constant 0 : index
    %c0_3 = arith.constant 0 : index
    %2 = vector.load %arg6[%c0_2, %c0_3] : memref<8x128xf32, #tpu.memory_space<vmem>>, vector<8x32xf32>
    tpu.vector_store %arg6[%c0_2, %c0_3], %1 {strides = array<i32>} : memref<8x128xf32, #tpu.memory_space<vmem>>, vector<8x32xf32>,
    %c1 = arith.constant 1 : index
    %c0_4 = arith.constant 0 : index
    %c0_5 = arith.constant 0 : index
    %3 = vector.load %arg1[%c1, %c0_4, %c0_5] : memref<4x8x32xf32, #tpu.memory_space<vmem>>, vector<1x8x32xf32>
    %4 = vector.shape_cast %3 : vector<1x8x32xf32> to vector<8x32xf32>
    %c0_6 = arith.constant 0 : index
    %c32 = arith.constant 32 : index
    %5 = vector.load %arg6[%c0_6, %c32] : memref<8x128xf32, #tpu.memory_space<vmem>>, vector<8x32xf32>
    tpu.vector_store %arg6[%c0_6, %c32], %4 {strides = array<i32>} : memref<8x128xf32, #tpu.memory_space<vmem>>, vector<8x32xf32>,
    %c2 = arith.constant 2 : index
    %c0_7 = arith.constant 0 : index
    %c0_8 = arith.constant 0 : index
    %6 = vector.load %arg1[%c2, %c0_7, %c0_8] : memref<4x8x32xf32, #tpu.memory_space<vmem>>, vector<1x8x32xf32>
    %7 = vector.shape_cast %6 : vector<1x8x32xf32> to vector<8x32xf32>
    %c0_9 = arith.constant 0 : index
    %c64 = arith.constant 64 : index
    %8 = vector.load %arg6[%c0_9, %c64] : memref<8x128xf32, #tpu.memory_space<vmem>>, vector<8x32xf32>
    tpu.vector_store %arg6[%c0_9, %c64], %7 {strides = array<i32>} : memref<8x128xf32, #tpu.memory_space<vmem>>, vector<8x32xf32>,
    %c3 = arith.constant 3 : index
    %c0_10 = arith.constant 0 : index
    %c0_11 = arith.constant 0 : index
    %9 = vector.load %arg1[%c3, %c0_10, %c0_11] : memref<4x8x32xf32, #tpu.memory_space<vmem>>, vector<1x8x32xf32>
    %10 = vector.shape_cast %9 : vector<1x8x32xf32> to vector<8x32xf32>
    %c0_12 = arith.constant 0 : index
    %c96 = arith.constant 96 : index
    %11 = vector.load %arg6[%c0_12, %c96] : memref<8x128xf32, #tpu.memory_space<vmem>>, vector<8x32xf32>
    tpu.vector_store %arg6[%c0_12, %c96], %10 {strides = array<i32>} : memref<8x128xf32, #tpu.memory_space<vmem>>, vector<8x32xf32>,
    %c0_13 = arith.constant 0 : index
    %c0_14 = arith.constant 0 : index
    %12 = vector.load %arg6[%c0_13, %c0_14] : memref<8x128xf32, #tpu.memory_space<vmem>>, vector<8x128xf32>
    %c0_15 = arith.constant 0 : index
    %c0_16 = arith.constant 0 : index
    %13 = vector.load %arg4[%c0_15, %c0_16] : memref<1x128xi32, #tpu.memory_space<vmem>>, vector<1x128xi32>
    %c0_17 = arith.constant 0 : index
    %c0_18 = arith.constant 0 : index
    %14 = vector.load %arg3[%c0_17, %c0_18] : memref<8x1xf32, #tpu.memory_space<vmem>>, vector<8x1xf32>
    %15 = vector.broadcast %14 : vector<8x1xf32> to vector<8x128xf32>
    %16 = arith.addf %12, %15 : vector<8x128xf32>
    %c2_i32 = arith.constant 2 : i32
    %17 = tpu.dynamic_rotate %12 by %c2_i32 dim 1 : vector<8x128xf32>, i32 -> vector<8x128xf32>
    %c2_i32_19 = arith.constant 2 : i32
    %18 = vector.broadcast %c2_i32_19 : i32 to vector<1x128xi32>
    %19 = arith.cmpi sge, %13, %18 : vector<1x128xi32>
    %cst = arith.constant 0.000000e+00 : f32
    %20 = vector.shape_cast %19 : vector<1x128xi1> to vector<1x128xi1>
    %21 = vector.broadcast %20 : vector<1x128xi1> to vector<8x128xi1>
    %22 = vector.broadcast %cst : f32 to vector<8x128xf32>
    %23 = arith.select %21, %17, %22 : vector<8x128xi1>, vector<8x128xf32>
    %c0_20 = arith.constant 0 : index
    %c0_21 = arith.constant 0 : index
    %c0_22 = arith.constant 0 : index
    %24 = vector.load %arg2[%c0_20, %c0_21, %c0_22] : memref<3x8x8xbf16, #tpu.memory_space<vmem>>, vector<1x8x8xbf16>
    %25 = vector.shape_cast %24 : vector<1x8x8xbf16> to vector<8x8xbf16>
    %26 = arith.truncf %23 : vector<8x128xf32> to vector<8x128xbf16>
    %cst_23 = arith.constant dense<0.000000e+00> : vector<8x128xf32>
    %27 = tpu.matmul %25, %26, %cst_23 {dimension_numbers = #tpu.dot_dimension_numbers<[1], [0], [0], [1], [0, 0, 1, 1], [], []>} : vector<8x8xbf16>, vector<8x128xbf16>, vector<8x128xf32> -> vector<8x128xf32>
    %28 = arith.addf %16, %27 : vector<8x128xf32>
    %c1_24 = arith.constant 1 : index
    %c0_25 = arith.constant 0 : index
    %c0_26 = arith.constant 0 : index
    %29 = vector.load %arg2[%c1_24, %c0_25, %c0_26] : memref<3x8x8xbf16, #tpu.memory_space<vmem>>, vector<1x8x8xbf16>
    %30 = vector.shape_cast %29 : vector<1x8x8xbf16> to vector<8x8xbf16>
    %31 = arith.truncf %12 : vector<8x128xf32> to vector<8x128xbf16>
    %cst_27 = arith.constant dense<0.000000e+00> : vector<8x128xf32>
    %32 = tpu.matmul %30, %31, %cst_27 {dimension_numbers = #tpu.dot_dimension_numbers<[1], [0], [0], [1], [0, 0, 1, 1], [], []>} : vector<8x8xbf16>, vector<8x128xbf16>, vector<8x128xf32> -> vector<8x128xf32>
    %33 = arith.addf %28, %32 : vector<8x128xf32>
    %c126_i32 = arith.constant 126 : i32
    %34 = tpu.dynamic_rotate %12 by %c126_i32 dim 1 : vector<8x128xf32>, i32 -> vector<8x128xf32>
    %c30_i32 = arith.constant 30 : i32
    %35 = vector.broadcast %c30_i32 : i32 to vector<1x128xi32>
    %36 = arith.cmpi slt, %13, %35 : vector<1x128xi32>
    %cst_28 = arith.constant 0.000000e+00 : f32
    %37 = vector.shape_cast %36 : vector<1x128xi1> to vector<1x128xi1>
    %38 = vector.broadcast %37 : vector<1x128xi1> to vector<8x128xi1>
    %39 = vector.broadcast %cst_28 : f32 to vector<8x128xf32>
    %40 = arith.select %38, %34, %39 : vector<8x128xi1>, vector<8x128xf32>
    %c2_29 = arith.constant 2 : index
    %c0_30 = arith.constant 0 : index
    %c0_31 = arith.constant 0 : index
    %41 = vector.load %arg2[%c2_29, %c0_30, %c0_31] : memref<3x8x8xbf16, #tpu.memory_space<vmem>>, vector<1x8x8xbf16>
    %42 = vector.shape_cast %41 : vector<1x8x8xbf16> to vector<8x8xbf16>
    %43 = arith.truncf %40 : vector<8x128xf32> to vector<8x128xbf16>
    %cst_32 = arith.constant dense<0.000000e+00> : vector<8x128xf32>
    %44 = tpu.matmul %42, %43, %cst_32 {dimension_numbers = #tpu.dot_dimension_numbers<[1], [0], [0], [1], [0, 0, 1, 1], [], []>} : vector<8x8xbf16>, vector<8x128xbf16>, vector<8x128xf32> -> vector<8x128xf32>
    %45 = arith.addf %33, %44 : vector<8x128xf32>
    %c0_33 = arith.constant 0 : index
    %c0_34 = arith.constant 0 : index
    %46 = vector.load %arg6[%c0_33, %c0_34] : memref<8x128xf32, #tpu.memory_space<vmem>>, vector<8x128xf32>
    tpu.vector_store %arg6[%c0_33, %c0_34], %45 {strides = array<i32>} : memref<8x128xf32, #tpu.memory_space<vmem>>, vector<8x128xf32>,
    %c0_35 = arith.constant 0 : index
    %c0_36 = arith.constant 0 : index
    %47 = vector.load %arg6[%c0_35, %c0_36] : memref<8x128xf32, #tpu.memory_space<vmem>>, vector<8x32xf32>
    %c0_37 = arith.constant 0 : index
    %c0_38 = arith.constant 0 : index
    %c0_39 = arith.constant 0 : index
    %48 = vector.load %arg5[%c0_37, %c0_38, %c0_39] : memref<4x8x32xf32, #tpu.memory_space<vmem>>, vector<1x8x32xf32>
    %49 = vector.shape_cast %48 : vector<1x8x32xf32> to vector<8x32xf32>
    %50 = vector.shape_cast %47 : vector<8x32xf32> to vector<1x8x32xf32>
    tpu.vector_store %arg5[%c0_37, %c0_38, %c0_39], %50 {strides = array<i32>} : memref<4x8x32xf32, #tpu.memory_space<vmem>>, vector<1x8x32xf32>,
    %c0_40 = arith.constant 0 : index
    %c32_41 = arith.constant 32 : index
    %51 = vector.load %arg6[%c0_40, %c32_41] : memref<8x128xf32, #tpu.memory_space<vmem>>, vector<8x32xf32>
    %c1_42 = arith.constant 1 : index
    %c0_43 = arith.constant 0 : index
    %c0_44 = arith.constant 0 : index
    %52 = vector.load %arg5[%c1_42, %c0_43, %c0_44] : memref<4x8x32xf32, #tpu.memory_space<vmem>>, vector<1x8x32xf32>
    %53 = vector.shape_cast %52 : vector<1x8x32xf32> to vector<8x32xf32>
    %54 = vector.shape_cast %51 : vector<8x32xf32> to vector<1x8x32xf32>
    tpu.vector_store %arg5[%c1_42, %c0_43, %c0_44], %54 {strides = array<i32>} : memref<4x8x32xf32, #tpu.memory_space<vmem>>, vector<1x8x32xf32>,
    %c0_45 = arith.constant 0 : index
    %c64_46 = arith.constant 64 : index
    %55 = vector.load %arg6[%c0_45, %c64_46] : memref<8x128xf32, #tpu.memory_space<vmem>>, vector<8x32xf32>
    %c2_47 = arith.constant 2 : index
    %c0_48 = arith.constant 0 : index
    %c0_49 = arith.constant 0 : index
    %56 = vector.load %arg5[%c2_47, %c0_48, %c0_49] : memref<4x8x32xf32, #tpu.memory_space<vmem>>, vector<1x8x32xf32>
    %57 = vector.shape_cast %56 : vector<1x8x32xf32> to vector<8x32xf32>
    %58 = vector.shape_cast %55 : vector<8x32xf32> to vector<1x8x32xf32>
    tpu.vector_store %arg5[%c2_47, %c0_48, %c0_49], %58 {strides = array<i32>} : memref<4x8x32xf32, #tpu.memory_space<vmem>>, vector<1x8x32xf32>,
    %c0_50 = arith.constant 0 : index
    %c96_51 = arith.constant 96 : index
    %59 = vector.load %arg6[%c0_50, %c96_51] : memref<8x128xf32, #tpu.memory_space<vmem>>, vector<8x32xf32>
    %c3_52 = arith.constant 3 : index
    %c0_53 = arith.constant 0 : index
    %c0_54 = arith.constant 0 : index
    %60 = vector.load %arg5[%c3_52, %c0_53, %c0_54] : memref<4x8x32xf32, #tpu.memory_space<vmem>>, vector<1x8x32xf32>
    %61 = vector.shape_cast %60 : vector<1x8x32xf32> to vector<8x32xf32>
    %62 = vector.shape_cast %59 : vector<8x32xf32> to vector<1x8x32xf32>
    tpu.vector_store %arg5[%c3_52, %c0_53, %c0_54], %62 {strides = array<i32>} : memref<4x8x32xf32, #tpu.memory_space<vmem>>, vector<1x8x32xf32>,
    return
  }
  func.func @transform_0(%arg0: i32) -> (i32, i32, i32) {
    %c0_i32 = arith.constant 0 : i32
    %c0_i32_0 = arith.constant 0 : i32
    %c0_i32_1 = arith.constant 0 : i32
    return %arg0, %c0_i32, %c0_i32_0 : i32, i32, i32
  }
  func.func @transform_1(%arg0: i32) -> (i32, i32, i32) {
    %c0_i32 = arith.constant 0 : i32
    %c0_i32_0 = arith.constant 0 : i32
    %c0_i32_1 = arith.constant 0 : i32
    %c0_i32_2 = arith.constant 0 : i32
    return %c0_i32, %c0_i32_0, %c0_i32_1 : i32, i32, i32
  }
  func.func @transform_2(%arg0: i32) -> (i32, i32) {
    %c0_i32 = arith.constant 0 : i32
    %c0_i32_0 = arith.constant 0 : i32
    %c0_i32_1 = arith.constant 0 : i32
    return %c0_i32, %c0_i32_0 : i32, i32
  }
  func.func @transform_3(%arg0: i32) -> (i32, i32) {
    %c0_i32 = arith.constant 0 : i32
    %c0_i32_0 = arith.constant 0 : i32
    %c0_i32_1 = arith.constant 0 : i32
    return %c0_i32, %c0_i32_0 : i32, i32
  }
  func.func @transform_4(%arg0: i32) -> (i32, i32, i32) {
    %c0_i32 = arith.constant 0 : i32
    %c0_i32_0 = arith.constant 0 : i32
    %c0_i32_1 = arith.constant 0 : i32
    return %arg0, %c0_i32, %c0_i32_0 : i32, i32, i32
  }
}

</mosaic_0001>

<llo_original>
// kernel: tpu_custom_call.1
$region0: #{tpu_custom_call.1}
  #allocation0 [shape = 'u32[]', space=smem, size = 0x4, offset = 0x4, fixed_abs, tag = 'smem constant byte address 0x4 - core index']
  #allocation1 [shape = 'u32[72,128]{1,0:T(1,128)}', space=vmem, size = 0x9000, scoped, tag = 'internal scratch']
  #allocation2 [shape = 'f32[8,128]{1,0:T(8,128)}', space=vmem, size = 0x1000, scoped, tag = 'scratch operand']
  %s0 = inlined_call_operand.hbm [shape: f32[8,8,32], index: 0, kind: input, shape index: {}]
  %s1 = inlined_call_operand.hbm [shape: bf16[3,8,8], index: 1, kind: input, shape index: {}]
  %s2 = inlined_call_operand.vmem [shape: f32[8,1], index: 2, kind: input, shape index: {}]
  %s3 = inlined_call_operand.vmem [shape: s32[1,128], index: 3, kind: input, shape index: {}]
  %s4 = inlined_call_operand.hbm [shape: f32[8,8,32], index: 4, kind: output, shape index: {}]
  %s5 = sld [smem:[#allocation0]]
  $region57: #{tpu_custom_call.1} parent=0
    _
  %s7 = ssub.s32 1, %s5
  %s8 = scalar_select 0, %s7, %s5
  $region1: #{tpu_custom_call.1} parent=0
    #allocation3 [shape = 'u8[32768]{0}', space=vmem, size = 0x8000, scoped, tag = 'input window, operand 0']
    #allocation4 [shape = 's32[2]{0}', space=sflag, size = 0x8, scoped, tag = 'scoped memory for tpu_custom_call.1']
    #allocation5 [shape = 's32[2]{0}', space=sflag, size = 0x8, scoped, tag = 'scoped memory for tpu_custom_call.1']
    #allocation6 [shape = 'u8[6144]{0}', space=vmem, size = 0x1800, scoped, tag = 'input window, operand 1, single buffered']
    #allocation7 [shape = 's32[1]{0}', space=sflag, size = 0x4, scoped, tag = 'scoped memory for tpu_custom_call.1']
    #allocation8 [shape = 'u8[32768]{0}', space=vmem, size = 0x8000, scoped, tag = 'output window, operand 0']
    %9 = vsyncpa [#allocation4], 0
    %s10 = scalar_lea.sflag [#allocation4], 1
    %11 = vsyncpa %s10, 0
    %12 = vsyncpa [#allocation7], 0
    %13 = vsyncpa [#allocation5], 0
    %s14 = scalar_lea.sflag [#allocation5], 1
    %15 = vsyncpa %s14, 0
    loop: start=0, step=1, limit=4
    $region2: #{tpu_custom_call.1} parent=1 // loop_pre_header
      _
    $region3: #{tpu_custom_call.1} parent=1 // loop_header
      %s17 = sphi 0, %s21
      %p18 = scmp.ge.s32.totalorder %s17, 4
      %s27 = sphi 0, %s29
      %s30 = sphi 0, %s27
      %s31 = sphi 0, %s30
      %s47 = sphi 0, %s31
      %s51 = sphi 0, %s51
      %s53 = sphi 0, %s51
      %s54 = sphi 0, %s53
      %s68 = sphi 0, %s54
      %s72 = sphi 0, %s72
      %s74 = sphi 0, %s72
      %s75 = sphi 0, %s74
      %s89 = sphi 0, %s75
      %s93 = sphi 0, %s93
      %s95 = sphi 0, %s93
      %s96 = sphi 0, %s95
      %s110 = sphi 0, %s96
      %s116 = sphi 0, %s118
      %s119 = sphi 0, %s116
      %s120 = sphi 0, %s119
      %s136 = sphi 0, %s120
    $region4: #{tpu_custom_call.1} parent=1 // loop_header_branch
      %20 = sbr.rel (%p18) target = $region8
    $region5: #{tpu_custom_call.1} parent=1 // loop_body
      %s22 = ssub.s32 %s17, 1
      %s23 = ssub.s32 %s17, 2
      %s24 = sadd.s32 %s17, 1
      %s25 = ssub.s32 %s17, %s24
      %p26 = scmp.eq.s32.totalorder %s25, 0
      %s28 = sadd.s32 %s27, 1
      %s29 = scalar_select %p26, %s27, %s28
      %p32 = pneg %p26
      %p33 = scmp.eq.s32.totalorder %s17, 1
      %p34 = por %p32, %p33
      %p35 = scmp.ne.s32.totalorder %s27, %s30
      %p36 = scmp.eq.s32.totalorder %s17, 0
      %p37 = por %p35, %p36
      %p38 = scmp.ne.s32.totalorder %s27, %s30
      %p39 = scmp.eq.s32.totalorder %s22, 1
      %p40 = por %p38, %p39
      %p41 = scmp.ne.s32.totalorder %s30, %s31
      %p42 = scmp.eq.s32.totalorder %s22, 0
      %p43 = por %p41, %p42
      %p44 = scmp.ne.s32.totalorder %s30, %s31
      %p45 = scmp.eq.s32.totalorder %s23, 1
      %p46 = por %p44, %p45
      %p48 = scmp.ne.s32.totalorder %s31, %s47
      %p49 = scmp.eq.s32.totalorder %s23, 0
      %p50 = por %p48, %p49
      %s52 = sadd.s32 %s51, 1
      %p55 = scmp.eq.s32.totalorder %s17, 1
      %p56 = scmp.ne.s32.totalorder %s51, %s53
      %p57 = scmp.eq.s32.totalorder %s17, 0
      %p58 = por %p56, %p57
      %p59 = scmp.ne.s32.totalorder %s51, %s53
      %p60 = scmp.eq.s32.totalorder %s22, 1
      %p61 = por %p59, %p60
      %p62 = scmp.ne.s32.totalorder %s53, %s54
      %p63 = scmp.eq.s32.totalorder %s22, 0
      %p64 = por %p62, %p63
      %p65 = scmp.ne.s32.totalorder %s53, %s54
      %p66 = scmp.eq.s32.totalorder %s23, 1
      %p67 = por %p65, %p66
      %p69 = scmp.ne.s32.totalorder %s54, %s68
      %p70 = scmp.eq.s32.totalorder %s23, 0
      %p71 = por %p69, %p70
      %s73 = sadd.s32 %s72, 1
      %p76 = scmp.eq.s32.totalorder %s17, 1
      %p77 = scmp.ne.s32.totalorder %s72, %s74
      %p78 = scmp.eq.s32.totalorder %s17, 0
      %p79 = por %p77, %p78
      %p80 = scmp.ne.s32.totalorder %s72, %s74
      %p81 = scmp.eq.s32.totalorder %s22, 1
      %p82 = por %p80, %p81
      %p83 = scmp.ne.s32.totalorder %s74, %s75
      %p84 = scmp.eq.s32.totalorder %s22, 0
      %p85 = por %p83, %p84
      %p86 = scmp.ne.s32.totalorder %s74, %s75
      %p87 = scmp.eq.s32.totalorder %s23, 1
      %p88 = por %p86, %p87
      %p90 = scmp.ne.s32.totalorder %s75, %s89
      %p91 = scmp.eq.s32.totalorder %s23, 0
      %p92 = por %p90, %p91
      %s94 = sadd.s32 %s93, 1
      %p97 = scmp.eq.s32.totalorder %s17, 1
      %p98 = scmp.ne.s32.totalorder %s93, %s95
      %p99 = scmp.eq.s32.totalorder %s17, 0
      %p100 = por %p98, %p99
      %p101 = scmp.ne.s32.totalorder %s93, %s95
      %p102 = scmp.eq.s32.totalorder %s22, 1
      %p103 = por %p101, %p102
      %p104 = scmp.ne.s32.totalorder %s95, %s96
      %p105 = scmp.eq.s32.totalorder %s22, 0
      %p106 = por %p104, %p105
      %p107 = scmp.ne.s32.totalorder %s95, %s96
      %p108 = scmp.eq.s32.totalorder %s23, 1
      %p109 = por %p107, %p108
      %p111 = scmp.ne.s32.totalorder %s96, %s110
      %p112 = scmp.eq.s32.totalorder %s23, 0
      %p113 = por %p111, %p112
      %s114 = ssub.s32 %s17, %s24
      %p115 = scmp.eq.s32.totalorder %s114, 0
      %s117 = sadd.s32 %s116, 1
      %s118 = scalar_select %p115, %s116, %s117
      %p121 = pneg %p115
      %p122 = scmp.eq.s32.totalorder %s17, 1
      %p123 = por %p121, %p122
      %p124 = scmp.ne.s32.totalorder %s116, %s119
      %p125 = scmp.eq.s32.totalorder %s17, 0
      %p126 = por %p124, %p125
      %p127 = scmp.ne.s32.totalorder %s116, %s119
      %p128 = scmp.eq.s32.totalorder %s22, 1
      %p129 = por %p127, %p128
      %p130 = scmp.ne.s32.totalorder %s119, %s120
      %p131 = scmp.eq.s32.totalorder %s22, 0
      %p132 = por %p130, %p131
      %p133 = scmp.ne.s32.totalorder %s119, %s120
      %p134 = scmp.eq.s32.totalorder %s23, 1
      %p135 = por %p133, %p134
      %p137 = scmp.ne.s32.totalorder %s120, %s136
      %p138 = scmp.eq.s32.totalorder %s23, 0
      %p139 = por %p137, %p138
      %p140 = scmp.le.s32.totalorder 1, %s17
      %p141 = scmp.lt.s32.totalorder %s17, 3
      %p142 = pnand %p140, %p141
      %p143 = pneg %p142
      // Predicated region
      $region9: #{tpu_custom_call.1} parent=5 // pred_check
        _
      $region10: #{tpu_custom_call.1} parent=5 // pred_check_branch
        %145 = sbr.rel (%p142) target = $region12
      $region11: #{tpu_custom_call.1} parent=5 // pred_region
        %s146 = ssub.s32 %s17, 1
        // Predicated region
        $region13: #{tpu_custom_call.1} parent=11 // pred_check
          %p147 = pneg %p64
        $region14: #{tpu_custom_call.1} parent=11 // pred_check_branch
          %149 = sbr.rel (%p147) target = $region16
        $region15: #{tpu_custom_call.1} parent=11 // pred_region
          %151 = vsyncadd [#allocation7], 0
          %s152 = sshll.u32 %s1, 4
          %s153 = int_to_ptr.hbm [resolvable:$true] %s152
          %s154 = sshll.u32 [#allocation6], 4
          %s155 = int_to_ptr.vmem [resolvable:$true] %s154
          %160 = dma.hbm_to_vmem [thread:$0]  %s153, 192, %s155, [#allocation7], 64, 64, 4
        $region16: #{tpu_custom_call.1} parent=11 // pred_fallthru
          _
        // Predicated region
        $region17: #{tpu_custom_call.1} parent=11 // pred_check
          %p161 = pneg %p85
        $region18: #{tpu_custom_call.1} parent=11 // pred_check_branch
          %163 = sbr.rel (%p161) target = $region20
        $region19: #{tpu_custom_call.1} parent=11 // pred_region
          _
        $region20: #{tpu_custom_call.1} parent=11 // pred_fallthru
          _
        // Predicated region
        $region21: #{tpu_custom_call.1} parent=11 // pred_check
          %p164 = pneg %p106
        $region22: #{tpu_custom_call.1} parent=11 // pred_check_branch
          %166 = sbr.rel (%p164) target = $region24
        $region23: #{tpu_custom_call.1} parent=11 // pred_region
          _
        $region24: #{tpu_custom_call.1} parent=11 // pred_fallthru
          _
      $region12: #{tpu_custom_call.1} parent=5 // pred_fallthru
        _
      %p167 = scmp.lt.s32.totalorder %s17, 2
      // Predicated region
      $region25: #{tpu_custom_call.1} parent=5 // pred_check
        %p168 = pneg %p167
      $region26: #{tpu_custom_call.1} parent=5 // pred_check_branch
        %170 = sbr.rel (%p168) target = $region28
      $region27: #{tpu_custom_call.1} parent=5 // pred_region
        // Predicated region
        $region29: #{tpu_custom_call.1} parent=27 // pred_check
          %p171 = pneg %p37
        $region30: #{tpu_custom_call.1} parent=27 // pred_check_branch
          %173 = sbr.rel (%p171) target = $region32
        $region31: #{tpu_custom_call.1} parent=27 // pred_region
          %s174 = sand.u32 %s27, 1
          %s175 = scalar_lea.sflag [#allocation4], %s174
          %s176 = sand.u32 %s27, 1
          %s177 = smul.addr %s176, 32
          %s178 = scalar_lea.vmem [#allocation3], %s177
          %s179 = smul.u32 4, %s17
          %181 = vsyncadd %s175, 0
          %s182 = smul.addr %s179, 8
          %s183 = scalar_lea.hbm %s0, %s182
          %s184 = sshll.u32 %s183, 4
          %s185 = int_to_ptr.hbm [resolvable:$true] %s184
          %s186 = sshll.u32 %s178, 4
          %s187 = int_to_ptr.vmem [resolvable:$true] %s186
          %192 = dma.hbm_to_vmem [thread:$0]  %s185, 512, %s187, %s175, 128, 128, 8
        $region32: #{tpu_custom_call.1} parent=27 // pred_fallthru
          _
      $region28: #{tpu_custom_call.1} parent=5 // pred_fallthru
        _
      %p193 = scmp.le.s32.totalorder 1, %s17
      %p194 = scmp.lt.s32.totalorder %s17, 3
      %p195 = pnand %p193, %p194
      %p196 = pneg %p195
      // Predicated region
      $region33: #{tpu_custom_call.1} parent=5 // pred_check
        _
      $region34: #{tpu_custom_call.1} parent=5 // pred_check_branch
        %198 = sbr.rel (%p195) target = $region36
      $region35: #{tpu_custom_call.1} parent=5 // pred_region
        %s199 = ssub.s32 %s17, 1
        %s200 = sand.u32 %s30, 1
        %s201 = scalar_lea.sflag [#allocation4], %s200
        %s202 = sand.u32 %s30, 1
        %s203 = smul.addr %s202, 32
        %s204 = scalar_lea.vmem [#allocation3], %s203
        // Predicated region
        $region37: #{tpu_custom_call.1} parent=35 // pred_check
          %p205 = pneg %p43
        $region38: #{tpu_custom_call.1} parent=35 // pred_check_branch
          %207 = sbr.rel (%p205) target = $region40
        $region39: #{tpu_custom_call.1} parent=35 // pred_region
          %209 = dma.done %s201, 512
        $region40: #{tpu_custom_call.1} parent=35 // pred_fallthru
          _
        // Predicated region
        $region41: #{tpu_custom_call.1} parent=35 // pred_check
          %p210 = pneg %p64
        $region42: #{tpu_custom_call.1} parent=35 // pred_check_branch
          %212 = sbr.rel (%p210) target = $region44
        $region43: #{tpu_custom_call.1} parent=35 // pred_region
          %214 = dma.done [#allocation7], 192
        $region44: #{tpu_custom_call.1} parent=35 // pred_fallthru
          _
        %s215 = sand.u32 %s30, 1
        %s216 = scalar_lea.sflag [#allocation4], %s215
        %s217 = sand.u32 %s30, 1
        %s218 = smul.addr %s217, 32
        %s219 = scalar_lea.vmem [#allocation3], %s218
        %p220 = pneg %p43
        %p221 = pneg %p40
        %p222 = pneg %p64
        %p223 = pneg %p61
        %p224 = pneg %p85
        %p225 = pneg %p82
        %p226 = pneg %p106
        %p227 = pneg %p103
        %p228 = pneg %p132
        %p229 = pneg %p129
        %s230 = sand.u32 %s119, 1
        %s231 = scalar_lea.sflag [#allocation5], %s230
        %s232 = sand.u32 %s119, 1
        %s233 = smul.addr %s232, 32
        %s234 = scalar_lea.vmem [#allocation8], %s233
        %s235 = smul.u32 4, %s22
        %s236 = smul.u32 4, %s22
        %v238 = vld [vmem:[%s204] sm:$0xff]
        %vm239 = vcmask 261120
        %240 = vst.msk [vmem:[#allocation2] sm:$0xff] %vm239, %v238
        %s241 = scalar_lea.vmem %s204, 8 [#allocation3]
        %v242 = vld [vmem:[%s241] sm:$0xff]
        %244 = vrot.lane.b32.xlu0 %v242, 32
        %v245 = vpop.permute.xlu0 %244
        %vm247 = vcmask 523520
        %248 = vst.msk [vmem:[#allocation2] sm:$0xff] %vm247, %v245
        %s249 = scalar_lea.vmem %s204, 16 [#allocation3]
        %v250 = vld [vmem:[%s249] sm:$0xff]
        %252 = vrot.lane.b32.xlu0 %v250, 64
        %v253 = vpop.permute.xlu0 %252
        %vm255 = vcmask 785920
        %256 = vst.msk [vmem:[#allocation2] sm:$0xff] %vm255, %v253
        %s257 = scalar_lea.vmem %s204, 24 [#allocation3]
        %v258 = vld [vmem:[%s257] sm:$0xff]
        %260 = vrot.lane.b32.xlu0 %v258, 96
        %v261 = vpop.permute.xlu0 %260
        %vm263 = vcmask 1048320
        %264 = vst.msk [vmem:[#allocation2] sm:$0xff] %vm263, %v261
        %v265 = vld [vmem:[#allocation2] sm:$0xff]
        %v266 = vld [vmem:[%s3] sm:$0x1]
        %v267 = vld [vmem:[%s2] sm:$0xff]
        %269 = vset.pattern.permute.xlu0 0
        %270 = vperm.xlu0 %269, %v267
        %v271 = vpop.permute.xlu0 %270
        %v273 = vadd.f32 %v265, %v271
        %274 = vrot.lane.b32.xlu0 %v265, 2
        %v275 = vpop.permute.xlu0 %274
        %vm276 = vcmp.ge.s32.totalorder %v266, 2
        %v277 = vsel %vm276, 1, 0
        %v278 = vperm.slane %v277, 0
        %vm279 = vcmp.eq.s32.totalorder %v278, 1
        %v280 = vsel %vm279, %v275, 0.0
        %v281 = vld [vmem:[#allocation6] sm:$0xf]
        %v282 = vpack.c.bf16 %v280, %v280
        %vm283 = vcmask 64512
        %v285 = vsel %vm283, %v281, 0
        %vm287 = vcmask 1043456
        %v289 = vsel %vm287, %v282, 0
        %291 = vmatpush.bf16.msra.mxu0 0
        %292 = vmatpush.bf16.msra.mxu0 0
        %293 = vmatpush.bf16.msra.mxu0 0
        %294 = vmatpush.bf16.msra.mxu0 0
        %295 = vmatpush.bf16.msra.mxu0 0
        %296 = vmatpush.bf16.msra.mxu0 0
        %297 = vmatpush.bf16.msra.mxu0 0
        %298 = vmatpush.bf16.msra.mxu0 %v289
        %299 = vmatmul.bf16.gmra.mxu0 %v285
        %v300 = vpop.f32.mrf.mxu0
        %v301 = vadd.f32 0.0, %v300
        %v302 = vpop.f32.mrf.mxu0
        %303 = vdwg.mxu0
        %v304 = vadd.f32 %v273, %v301
        %s305 = scalar_lea.vmem [#allocation6], 4
        %v306 = vld [vmem:[%s305] sm:$0xf]
        %v307 = vpack.c.bf16 %v265, %v265
        %v309 = vsel %vm283, %v306, 0
        %v312 = vsel %vm287, %v307, 0
        %314 = vmatpush.bf16.msra.mxu0 0
        %315 = vmatpush.bf16.msra.mxu0 0
        %316 = vmatpush.bf16.msra.mxu0 0
        %317 = vmatpush.bf16.msra.mxu0 0
        %318 = vmatpush.bf16.msra.mxu0 0
        %319 = vmatpush.bf16.msra.mxu0 0
        %320 = vmatpush.bf16.msra.mxu0 0
        %321 = vmatpush.bf16.msra.mxu0 %v312
        %322 = vmatmul.bf16.gmra.mxu0 %v309
        %v323 = vpop.f32.mrf.mxu0
        %v324 = vadd.f32 0.0, %v323
        %v325 = vpop.f32.mrf.mxu0
        %326 = vdwg.mxu0
        %v327 = vadd.f32 %v304, %v324
        %328 = vrot.lane.b32.xlu0 %v265, 126
        %v329 = vpop.permute.xlu0 %328
        %vm330 = vcmp.lt.s32.totalorder %v266, 30
        %v331 = vsel %vm330, 1, 0
        %v332 = vperm.slane %v331, 0
        %vm333 = vcmp.eq.s32.totalorder %v332, 1
        %v334 = vsel %vm333, %v329, 0.0
        %s335 = scalar_lea.vmem [#allocation6], 8
        %v336 = vld [vmem:[%s335] sm:$0xf]
        %v337 = vpack.c.bf16 %v334, %v334
        %v339 = vsel %vm283, %v336, 0
        %v342 = vsel %vm287, %v337, 0
        %344 = vmatpush.bf16.msra.mxu0 0
        %345 = vmatpush.bf16.msra.mxu0 0
        %346 = vmatpush.bf16.msra.mxu0 0
        %347 = vmatpush.bf16.msra.mxu0 0
        %348 = vmatpush.bf16.msra.mxu0 0
        %349 = vmatpush.bf16.msra.mxu0 0
        %350 = vmatpush.bf16.msra.mxu0 0
        %351 = vmatpush.bf16.msra.mxu0 %v342
        %352 = vmatmul.bf16.gmra.mxu0 %v339
        %v353 = vpop.f32.mrf.mxu0
        %v354 = vadd.f32 0.0, %v353
        %v355 = vpop.f32.mrf.mxu0
        %356 = vdwg.mxu0
        %v357 = vadd.f32 %v327, %v354
        %358 = vst [vmem:[#allocation2] sm:$0xff] %v357
        %v359 = vld [vmem:[#allocation2] sm:$0xff]
        %360 = vst.msk [vmem:[%s234] sm:$0xff] %vm239, %v359
        %v361 = vld [vmem:[#allocation2] sm:$0xff]
        %363 = vrot.lane.b32.xlu0 %v361, 96
        %v364 = vpop.permute.xlu0 %363
        %s366 = scalar_lea.vmem %s234, 8 [#allocation8]
        %367 = vst.msk [vmem:[%s366] sm:$0xff] %vm239, %v364
        %v368 = vld [vmem:[#allocation2] sm:$0xff]
        %370 = vrot.lane.b32.xlu0 %v368, 64
        %v371 = vpop.permute.xlu0 %370
        %s373 = scalar_lea.vmem %s234, 16 [#allocation8]
        %374 = vst.msk [vmem:[%s373] sm:$0xff] %vm239, %v371
        %v375 = vld [vmem:[#allocation2] sm:$0xff]
        %377 = vrot.lane.b32.xlu0 %v375, 32
        %v378 = vpop.permute.xlu0 %377
        %s380 = scalar_lea.vmem %s234, 24 [#allocation8]
        %381 = vst.msk [vmem:[%s380] sm:$0xff] %vm239, %v378
        %s382 = sand.u32 %s119, 1
        %s383 = scalar_lea.sflag [#allocation5], %s382
        %s384 = sand.u32 %s119, 1
        %s385 = smul.addr %s384, 32
        %s386 = scalar_lea.vmem [#allocation8], %s385
        // Predicated region
        $region45: #{tpu_custom_call.1} parent=35 // pred_check
          %p387 = pneg %p129
        $region46: #{tpu_custom_call.1} parent=35 // pred_check_branch
          %389 = sbr.rel (%p387) target = $region48
        $region47: #{tpu_custom_call.1} parent=35 // pred_region
          %s390 = smul.u32 4, %s22
          %392 = vsyncadd %s383, 0
          %s393 = smul.addr %s390, 8
          %s394 = scalar_lea.hbm %s4, %s393
          %s395 = sshll.u32 %s386, 4
          %s396 = int_to_ptr.vmem [resolvable:$true] %s395
          %s397 = sshll.u32 %s394, 4
          %s398 = int_to_ptr.hbm [resolvable:$true] %s397
          %403 = dma.vmem_to_hbm [thread:$0]  %s396, 512, %s398, %s383, 128, 128, 8
        $region48: #{tpu_custom_call.1} parent=35 // pred_fallthru
          _
      $region36: #{tpu_custom_call.1} parent=5 // pred_fallthru
        _
      %p404 = scmp.le.s32.totalorder 2, %s17
      // Predicated region
      $region49: #{tpu_custom_call.1} parent=5 // pred_check
        %p405 = pneg %p404
      $region50: #{tpu_custom_call.1} parent=5 // pred_check_branch
        %407 = sbr.rel (%p405) target = $region52
      $region51: #{tpu_custom_call.1} parent=5 // pred_region
        %s408 = ssub.s32 %s17, 2
        // Predicated region
        $region53: #{tpu_custom_call.1} parent=51 // pred_check
          %p409 = pneg %p135
        $region54: #{tpu_custom_call.1} parent=51 // pred_check_branch
          %411 = sbr.rel (%p409) target = $region56
        $region55: #{tpu_custom_call.1} parent=51 // pred_region
          %s412 = sand.u32 %s120, 1
          %s413 = scalar_lea.sflag [#allocation5], %s412
          %s414 = sand.u32 %s120, 1
          %s415 = smul.addr %s414, 32
          %s416 = scalar_lea.vmem [#allocation8], %s415
          %418 = dma.done %s413, 512
        $region56: #{tpu_custom_call.1} parent=51 // pred_fallthru
          _
      $region52: #{tpu_custom_call.1} parent=5 // pred_fallthru
        _
    $region6: #{tpu_custom_call.1} parent=1 // loop_footer
      %s21 = sadd.s32 1, %s17
    $region7: #{tpu_custom_call.1} parent=1 // loop_footer_branch
      %16 = sbr.rel target = $region3
    $region8: #{tpu_custom_call.1} parent=1 // loop_exit
      _
    %419 = vsyncpa [#allocation4], 1
    %s420 = scalar_lea.sflag [#allocation4], 1
    %421 = vsyncpa %s420, 1
    %422 = vsyncpa [#allocation7], 1
    %423 = vsyncpa [#allocation5], 1
    %s424 = scalar_lea.sflag [#allocation5], 1
    %425 = vsyncpa %s424, 1

</llo_original>
